<compile_context>
chip_gen: v6e
topology: v6e:2x2x1
jax: 0.10.0
libtpu: 0.0.40
codegen_flags: <defaults>
</compile_context>

<pallas_src>
import jax
import jax.numpy as jnp
from jax import lax
from jax.experimental import pallas as pl
from jax.experimental.pallas import tpu as pltpu


def _apply_activation(v, activation):
    if activation == "ReLU":
        return jnp.maximum(v, 0.0)
    if activation == "LeakyReLU":
        return jnp.where(v > 0, v, 0.01 * v)
    if activation == "Tanh":
        return jnp.tanh(v)
    if activation == "Sigmoid":
        return jax.nn.sigmoid(v)
    raise ValueError(f"unsupported activation: {activation}")


def _make_kernel(kernel_size, dilation, activation, block_b, l_conv, matmul_dtype):
    """Per-batch-block kernel. All hyperparameters are static (closed over)."""

    def kernel(x_ref, w_ref, gamma_ref, beta_ref, o_ref):
        # x_ref    : (block_b, Cin, L)       native-layout input slab for this block
        # w_ref    : (Cout, K*Cin)           fused conv weight, row index = k*Cin + i
        # gamma_ref: (1, Cout, block_b)      FiLM scale for this batch block
        # beta_ref : (1, Cout, block_b)      FiLM shift (conv bias folded in)
        # o_ref    : (block_b, Cout, l_conv) native-layout output slab
        # Gather the K dilated tap windows once (unit-stride lane slices), then
        # stack them along the channel axis ONCE for the whole batch block.
        taps = [x_ref[:, :, k * dilation: k * dilation + l_conv]
                for k in range(kernel_size)]
        xs = jnp.concatenate(taps, axis=1)                 # (block_b, K*Cin, l_conv)
        w = w_ref[...]                                     # (Cout, K*Cin)
        if matmul_dtype is not None:
            xs = xs.astype(matmul_dtype)                   # bf16 MXU operands,
            w = w.astype(matmul_dtype)                     # f32 accumulation below

        for b in range(block_b):                           # static unroll, block_b <= 8
            # One fused MXU matmul per batch element; result already in the
            # output's (Cout, l_conv) orientation - no relayout needed.
            acc = jnp.dot(w, xs[b], preferred_element_type=jnp.float32)

            # FiLM affine in f32 (conv bias folded into beta in the wrapper).
            g = gamma_ref[0, :, b:b + 1]                   # (Cout, 1), static slice
            bt = beta_ref[0, :, b:b + 1]
            acc = acc * g + bt

            acc = _apply_activation(acc, activation)
            o_ref[b] = acc.astype(o_ref.dtype)             # dense (Cout, l_conv) store

    return kernel


def conv_block_forward(x, y, w_conv, b_conv, w_adpt, b_adpt, *,
                       kernel_size, stride, dilation, activation,
                       matmul_dtype=None):
    """x: (N, Cin, L) f32; y: (N, cond_dim) f32 or None -> (N, Cout, Lout) f32."""
    N, Cin, L = x.shape
    Cout = w_conv.shape[0]
    l_conv = L - dilation * (kernel_size - 1)          # unit-stride VALID conv length

    # ---- wrapper-side plumbing (tiny XLA ops; no HBM pass over x/output) ----
    # Fused, tap-major conv weight: row index = k*Cin + i.
    w_fused = jnp.transpose(w_conv, (0, 2, 1)).reshape(Cout, kernel_size * Cin)
    if matmul_dtype is not None:
        w_fused = w_fused.astype(matmul_dtype)

    if y is not None:
        p = y @ w_adpt.T + b_adpt                      # one XLA GEMM, (N, 2*Cout)
        gamma = p[:, :Cout]                            # (N, Cout)
        beta = p[:, Cout:] + gamma * b_conv[None, :]   # fold conv bias into beta
    else:
        gamma = jnp.ones((N, Cout), jnp.float32)
        beta = jnp.broadcast_to(b_conv[None, :].astype(jnp.float32), (N, Cout))

    # Batch blocking: <=8 elements per step, and >=2 grid steps whenever N>=2
    # so dimension_semantics=("parallel",) can shard across both v7x TensorCores.
    if N == 1:
        block_b = 1
    else:
        block_b = min(8, max(1, N // 2))
        while N % block_b:
            block_b -= 1
    n_blocks = N // block_b

    # FiLM params laid out per batch block: (n_blocks, Cout, block_b); tiny arrays.
    gamma_blk = gamma.reshape(n_blocks, block_b, Cout).transpose(0, 2, 1)
    beta_blk = beta.reshape(n_blocks, block_b, Cout).transpose(0, 2, 1)

    kern = _make_kernel(kernel_size, dilation, activation, block_b, l_conv, matmul_dtype)

    out_full = pl.pallas_call(
        kern,
        out_shape=jax.ShapeDtypeStruct((N, Cout, l_conv), x.dtype),
        grid_spec=pltpu.PrefetchScalarGridSpec(
            num_scalar_prefetch=0,
            grid=(n_blocks,),
            in_specs=[
                pl.BlockSpec((block_b, Cin, L), lambda g: (g, 0, 0)),
                pl.BlockSpec((Cout, kernel_size * Cin), lambda g: (0, 0)),
                pl.BlockSpec((1, Cout, block_b), lambda g: (g, 0, 0)),
                pl.BlockSpec((1, Cout, block_b), lambda g: (g, 0, 0)),
            ],
            out_specs=pl.BlockSpec((block_b, Cout, l_conv), lambda g: (g, 0, 0)),
        ),
        compiler_params=pltpu.CompilerParams(
            dimension_semantics=("parallel",),
            # Raise v5e's 16 MiB scoped default; stays within v7x's 64 MiB physical.
            vmem_limit_bytes=32 * 1024 * 1024,
        ),
    )(x, w_fused, gamma_blk, beta_blk)

    if stride == 1:
        return out_full
    # TODO(synk): strided path: downsample in XLA for now; production version should
    # use a polyphase decomposition or strided DMA inside the kernel instead.
    return out_full[:, :, ::stride]


def _reference(x, y, w_conv, b_conv, w_adpt, b_adpt, *, stride, dilation, activation):
    """Pure-JAX reference reproducing the PyTorch forward semantics."""
    Cout = w_conv.shape[0]
    out = lax.conv_general_dilated(
        x, w_conv, window_strides=(stride,), padding="VALID",
        rhs_dilation=(dilation,), dimension_numbers=("NCH", "OIH", "NCH"))
    out = out + b_conv.reshape(1, Cout, 1)
    if y is not None:
        p = y @ w_adpt.T + b_adpt                      # (N, 2*Cout)
        gamma = p[:, :Cout][:, :, None]
        beta = p[:, Cout:][:, :, None]
        out = out * gamma + beta
    return _apply_activation(out, activation)


if __name__ == "__main__":
    # Module hyperparameters (small, consistent with ConvolutionalBlock.__init__).
    in_channels, out_channels = 4, 4
    kernel_size, dilation = 3, 2
    cond_dim = 8
    batch, length = 2, 16

    key = jax.random.PRNGKey(0)
    k_x, k_y, k_wc, k_bc, k_wa, k_ba = jax.random.split(key, 6)

    x = jax.random.normal(k_x, (batch, in_channels, length), jnp.float32)
    y = jax.random.normal(k_y, (batch, cond_dim), jnp.float32)

    w_conv = 0.2 * jax.random.normal(k_wc, (out_channels, in_channels, kernel_size), jnp.float32)
    b_conv = 0.1 * jax.random.normal(k_bc, (out_channels,), jnp.float32)
    w_adpt = 0.2 * jax.random.normal(k_wa, (out_channels * 2, cond_dim), jnp.float32)
    b_adpt = 0.1 * jax.random.normal(k_ba, (out_channels * 2,), jnp.float32)

    # (activation, y, stride, matmul_dtype, atol/rtol)
    cases = (
        ("ReLU", y, 1, None, 1e-4),            # conditioned, module default path
        ("Tanh", y, 1, None, 1e-4),            # conditioned, EUP activation
        ("ReLU", None, 1, None, 1e-4),         # unconditioned
        ("ReLU", y, 2, None, 1e-4),            # strided conv path
        ("ReLU", y, 1, jnp.bfloat16, 2e-2),    # bf16 MXU operands, f32 accumulation
    )
    for act, y_in, stride, mdt, tol in cases:
        out = conv_block_forward(
            x, y_in, w_conv, b_conv, w_adpt, b_adpt,
            kernel_size=kernel_size, stride=stride, dilation=dilation,
            activation=act, matmul_dtype=mdt)
        out = jax.block_until_ready(out)
        ref = _reference(x, y_in, w_conv, b_conv, w_adpt, b_adpt,
                         stride=stride, dilation=dilation, activation=act)
        assert out.shape == ref.shape, (out.shape, ref.shape)
        assert jnp.allclose(out, ref, atol=tol, rtol=tol), (
            f"mismatch vs reference (activation={act}, stride={stride}, "
            f"cond={'yes' if y_in is not None else 'no'}, matmul_dtype={mdt})")

    print("KERNEL_OK")
</pallas_src>

<mosaic_0001>
module attributes {stable_mosaic.version = 11 : i64} {
  func.func @kernel(%arg0: i32, %arg1: memref<1x4x16xf32, #tpu.memory_space<vmem>>, %arg2: memref<4x12xf32, #tpu.memory_space<vmem>>, %arg3: memref<1x4x1xf32, #tpu.memory_space<vmem>>, %arg4: memref<1x4x1xf32, #tpu.memory_space<vmem>>, %arg5: memref<1x4x12xf32, #tpu.memory_space<vmem>>) attributes {dimension_semantics = [#tpu.dimension_semantics<parallel>], iteration_bounds = array<i64: 2>, scalar_prefetch = 0 : i64, scratch_operands = 0 : i64, tpu.core_type = #tpu.core_type<tc>, window_params = [{transform_indices = @transform_0, window_bounds = array<i64: 1, 4, 16>}, {pipeline_mode = #tpu.pipeline_mode<synchronous>, transform_indices = @transform_1, window_bounds = array<i64: 4, 12>}, {transform_indices = @transform_2, window_bounds = array<i64: 1, 4, 1>}, {transform_indices = @transform_3, window_bounds = array<i64: 1, 4, 1>}, {transform_indices = @transform_4, window_bounds = array<i64: 1, 4, 12>}]} {
    %c0 = arith.constant 0 : index
    %c0_0 = arith.constant 0 : index
    %c0_1 = arith.constant 0 : index
    %0 = vector.load %arg1[%c0, %c0_0, %c0_1] : memref<1x4x16xf32, #tpu.memory_space<vmem>>, vector<1x4x12xf32>
    %c0_2 = arith.constant 0 : index
    %c0_3 = arith.constant 0 : index
    %c2 = arith.constant 2 : index
    %1 = vector.load %arg1[%c0_2, %c0_3, %c2] : memref<1x4x16xf32, #tpu.memory_space<vmem>>, vector<1x4x12xf32>
    %c0_4 = arith.constant 0 : index
    %c0_5 = arith.constant 0 : index
    %c4 = arith.constant 4 : index
    %2 = vector.load %arg1[%c0_4, %c0_5, %c4] : memref<1x4x16xf32, #tpu.memory_space<vmem>>, vector<1x4x12xf32>
    %3 = tpu.concatenate %0, %1, %2 in 1 : vector<1x4x12xf32>, vector<1x4x12xf32>, vector<1x4x12xf32> -> vector<1x12x12xf32>
    %c0_6 = arith.constant 0 : index
    %c0_7 = arith.constant 0 : index
    %4 = vector.load %arg2[%c0_6, %c0_7] : memref<4x12xf32, #tpu.memory_space<vmem>>, vector<4x12xf32>
    %5 = vector.shape_cast %3 : vector<1x12x12xf32> to vector<12x12xf32>
    %cst = arith.constant dense<0.000000e+00> : vector<4x12xf32>
    %6 = tpu.matmul %4, %5, %cst {dimension_numbers = #tpu.dot_dimension_numbers<[1], [0], [0], [1], [0, 0, 1, 1], [], []>} : vector<4x12xf32>, vector<12x12xf32>, vector<4x12xf32> -> vector<4x12xf32>
    %c0_8 = arith.constant 0 : index
    %c0_9 = arith.constant 0 : index
    %c0_10 = arith.constant 0 : index
    %7 = vector.load %arg3[%c0_8, %c0_9, %c0_10] : memref<1x4x1xf32, #tpu.memory_space<vmem>>, vector<1x4x1xf32>
    %8 = vector.shape_cast %7 : vector<1x4x1xf32> to vector<4x1xf32>
    %c0_11 = arith.constant 0 : index
    %c0_12 = arith.constant 0 : index
    %c0_13 = arith.constant 0 : index
    %9 = vector.load %arg4[%c0_11, %c0_12, %c0_13] : memref<1x4x1xf32, #tpu.memory_space<vmem>>, vector<1x4x1xf32>
    %10 = vector.shape_cast %9 : vector<1x4x1xf32> to vector<4x1xf32>
    %11 = vector.broadcast %8 : vector<4x1xf32> to vector<4x12xf32>
    %12 = arith.mulf %6, %11 : vector<4x12xf32>
    %13 = vector.broadcast %10 : vector<4x1xf32> to vector<4x12xf32>
    %14 = arith.addf %12, %13 : vector<4x12xf32>
    %cst_14 = arith.constant 0.000000e+00 : f32
    %15 = vector.broadcast %cst_14 : f32 to vector<4x12xf32>
    %16 = arith.maximumf %14, %15 : vector<4x12xf32>
    %c0_15 = arith.constant 0 : index
    %c0_16 = arith.constant 0 : index
    %c0_17 = arith.constant 0 : index
    %17 = vector.load %arg5[%c0_15, %c0_16, %c0_17] : memref<1x4x12xf32, #tpu.memory_space<vmem>>, vector<1x4x12xf32>
    %18 = vector.shape_cast %17 : vector<1x4x12xf32> to vector<4x12xf32>
    %19 = vector.shape_cast %16 : vector<4x12xf32> to vector<1x4x12xf32>
    tpu.vector_store %arg5[%c0_15, %c0_16, %c0_17], %19 {strides = array<i32>} : memref<1x4x12xf32, #tpu.memory_space<vmem>>, vector<1x4x12xf32>,
    return
  }
  func.func @transform_0(%arg0: i32) -> (i32, i32, i32) {
    %c0_i32 = arith.constant 0 : i32
    %c0_i32_0 = arith.constant 0 : i32
    %c0_i32_1 = arith.constant 0 : i32
    return %arg0, %c0_i32, %c0_i32_0 : i32, i32, i32
  }
  func.func @transform_1(%arg0: i32) -> (i32, i32) {
    %c0_i32 = arith.constant 0 : i32
    %c0_i32_0 = arith.constant 0 : i32
    %c0_i32_1 = arith.constant 0 : i32
    return %c0_i32, %c0_i32_0 : i32, i32
  }
  func.func @transform_2(%arg0: i32) -> (i32, i32, i32) {
    %c0_i32 = arith.constant 0 : i32
    %c0_i32_0 = arith.constant 0 : i32
    %c0_i32_1 = arith.constant 0 : i32
    return %arg0, %c0_i32, %c0_i32_0 : i32, i32, i32
  }
  func.func @transform_3(%arg0: i32) -> (i32, i32, i32) {
    %c0_i32 = arith.constant 0 : i32
    %c0_i32_0 = arith.constant 0 : i32
    %c0_i32_1 = arith.constant 0 : i32
    return %arg0, %c0_i32, %c0_i32_0 : i32, i32, i32
  }
  func.func @transform_4(%arg0: i32) -> (i32, i32, i32) {
    %c0_i32 = arith.constant 0 : i32
    %c0_i32_0 = arith.constant 0 : i32
    %c0_i32_1 = arith.constant 0 : i32
    return %arg0, %c0_i32, %c0_i32_0 : i32, i32, i32
  }
}

</mosaic_0001>

<llo_original>
// kernel: tpu_custom_call.1
$region0: #{tpu_custom_call.1}
  #allocation0 [shape = 'u32[]', space=smem, size = 0x4, offset = 0x4, fixed_abs, tag = 'smem constant byte address 0x4 - core index']
  #allocation1 [shape = 'u32[144,128]{1,0:T(1,128)}', space=vmem, size = 0x12000, scoped, tag = 'internal scratch']
  %s0 = inlined_call_operand.vmem [shape: f32[2,4,16], index: 0, kind: input, shape index: {}]
  %s1 = inlined_call_operand.vmem [shape: f32[4,12], index: 1, kind: input, shape index: {}]
  %s2 = inlined_call_operand.vmem [shape: f32[2,4,1], index: 2, kind: input, shape index: {}]
  %s3 = inlined_call_operand.vmem [shape: f32[2,4,1], index: 3, kind: input, shape index: {}]
  %s4 = inlined_call_operand.hbm [shape: f32[2,4,12], index: 4, kind: output, shape index: {}]
  %s5 = sld [smem:[#allocation0]]
  $region49: #{tpu_custom_call.1} parent=0
    _
  %s7 = ssub.s32 1, %s5
  %s8 = scalar_select 0, %s7, %s5
  $region1: #{tpu_custom_call.1} parent=0
    #allocation2 [shape = 'u8[4096]{0}', space=vmem, size = 0x1000, scoped, tag = 'output window, operand 0']
    #allocation3 [shape = 's32[2]{0}', space=sflag, size = 0x8, scoped, tag = 'scoped memory for tpu_custom_call.1']
    %9 = vsyncpa [#allocation3], 0
    %s10 = scalar_lea.sflag [#allocation3], 1
    %11 = vsyncpa %s10, 0
    loop: start=0, step=1, limit=4
    $region2: #{tpu_custom_call.1} parent=1 // loop_pre_header
      _
    $region3: #{tpu_custom_call.1} parent=1 // loop_header
      %s13 = sphi 0, %s17
      %p14 = scmp.ge.s32.totalorder %s13, 4
      %s23 = sphi 0, %s25
      %s26 = sphi 0, %s23
      %s27 = sphi 0, %s26
      %s43 = sphi 0, %s27
      %s47 = sphi 0, %s47
      %s49 = sphi 0, %s47
      %s50 = sphi 0, %s49
      %s64 = sphi 0, %s50
      %s70 = sphi 0, %s72
      %s73 = sphi 0, %s70
      %s74 = sphi 0, %s73
      %s90 = sphi 0, %s74
      %s96 = sphi 0, %s98
      %s99 = sphi 0, %s96
      %s100 = sphi 0, %s99
      %s116 = sphi 0, %s100
      %s122 = sphi 0, %s124
      %s125 = sphi 0, %s122
      %s126 = sphi 0, %s125
      %s142 = sphi 0, %s126
    $region4: #{tpu_custom_call.1} parent=1 // loop_header_branch
      %16 = sbr.rel (%p14) target = $region8
    $region5: #{tpu_custom_call.1} parent=1 // loop_body
      %s18 = ssub.s32 %s13, 1
      %s19 = ssub.s32 %s13, 2
      %s20 = sadd.s32 %s13, 1
      %s21 = ssub.s32 %s13, %s20
      %p22 = scmp.eq.s32.totalorder %s21, 0
      %s24 = sadd.s32 %s23, 1
      %s25 = scalar_select %p22, %s23, %s24
      %p28 = pneg %p22
      %p29 = scmp.eq.s32.totalorder %s13, 1
      %p30 = por %p28, %p29
      %p31 = scmp.ne.s32.totalorder %s23, %s26
      %p32 = scmp.eq.s32.totalorder %s13, 0
      %p33 = por %p31, %p32
      %p34 = scmp.ne.s32.totalorder %s23, %s26
      %p35 = scmp.eq.s32.totalorder %s18, 1
      %p36 = por %p34, %p35
      %p37 = scmp.ne.s32.totalorder %s26, %s27
      %p38 = scmp.eq.s32.totalorder %s18, 0
      %p39 = por %p37, %p38
      %p40 = scmp.ne.s32.totalorder %s26, %s27
      %p41 = scmp.eq.s32.totalorder %s19, 1
      %p42 = por %p40, %p41
      %p44 = scmp.ne.s32.totalorder %s27, %s43
      %p45 = scmp.eq.s32.totalorder %s19, 0
      %p46 = por %p44, %p45
      %s48 = sadd.s32 %s47, 1
      %p51 = scmp.eq.s32.totalorder %s13, 1
      %p52 = scmp.ne.s32.totalorder %s47, %s49
      %p53 = scmp.eq.s32.totalorder %s13, 0
      %p54 = por %p52, %p53
      %p55 = scmp.ne.s32.totalorder %s47, %s49
      %p56 = scmp.eq.s32.totalorder %s18, 1
      %p57 = por %p55, %p56
      %p58 = scmp.ne.s32.totalorder %s49, %s50
      %p59 = scmp.eq.s32.totalorder %s18, 0
      %p60 = por %p58, %p59
      %p61 = scmp.ne.s32.totalorder %s49, %s50
      %p62 = scmp.eq.s32.totalorder %s19, 1
      %p63 = por %p61, %p62
      %p65 = scmp.ne.s32.totalorder %s50, %s64
      %p66 = scmp.eq.s32.totalorder %s19, 0
      %p67 = por %p65, %p66
      %s68 = ssub.s32 %s13, %s20
      %p69 = scmp.eq.s32.totalorder %s68, 0
      %s71 = sadd.s32 %s70, 1
      %s72 = scalar_select %p69, %s70, %s71
      %p75 = pneg %p69
      %p76 = scmp.eq.s32.totalorder %s13, 1
      %p77 = por %p75, %p76
      %p78 = scmp.ne.s32.totalorder %s70, %s73
      %p79 = scmp.eq.s32.totalorder %s13, 0
      %p80 = por %p78, %p79
      %p81 = scmp.ne.s32.totalorder %s70, %s73
      %p82 = scmp.eq.s32.totalorder %s18, 1
      %p83 = por %p81, %p82
      %p84 = scmp.ne.s32.totalorder %s73, %s74
      %p85 = scmp.eq.s32.totalorder %s18, 0
      %p86 = por %p84, %p85
      %p87 = scmp.ne.s32.totalorder %s73, %s74
      %p88 = scmp.eq.s32.totalorder %s19, 1
      %p89 = por %p87, %p88
      %p91 = scmp.ne.s32.totalorder %s74, %s90
      %p92 = scmp.eq.s32.totalorder %s19, 0
      %p93 = por %p91, %p92
      %s94 = ssub.s32 %s13, %s20
      %p95 = scmp.eq.s32.totalorder %s94, 0
      %s97 = sadd.s32 %s96, 1
      %s98 = scalar_select %p95, %s96, %s97
      %p101 = pneg %p95
      %p102 = scmp.eq.s32.totalorder %s13, 1
      %p103 = por %p101, %p102
      %p104 = scmp.ne.s32.totalorder %s96, %s99
      %p105 = scmp.eq.s32.totalorder %s13, 0
      %p106 = por %p104, %p105
      %p107 = scmp.ne.s32.totalorder %s96, %s99
      %p108 = scmp.eq.s32.totalorder %s18, 1
      %p109 = por %p107, %p108
      %p110 = scmp.ne.s32.totalorder %s99, %s100
      %p111 = scmp.eq.s32.totalorder %s18, 0
      %p112 = por %p110, %p111
      %p113 = scmp.ne.s32.totalorder %s99, %s100
      %p114 = scmp.eq.s32.totalorder %s19, 1
      %p115 = por %p113, %p114
      %p117 = scmp.ne.s32.totalorder %s100, %s116
      %p118 = scmp.eq.s32.totalorder %s19, 0
      %p119 = por %p117, %p118
      %s120 = ssub.s32 %s13, %s20
      %p121 = scmp.eq.s32.totalorder %s120, 0
      %s123 = sadd.s32 %s122, 1
      %s124 = scalar_select %p121, %s122, %s123
      %p127 = pneg %p121
      %p128 = scmp.eq.s32.totalorder %s13, 1
      %p129 = por %p127, %p128
      %p130 = scmp.ne.s32.totalorder %s122, %s125
      %p131 = scmp.eq.s32.totalorder %s13, 0
      %p132 = por %p130, %p131
      %p133 = scmp.ne.s32.totalorder %s122, %s125
      %p134 = scmp.eq.s32.totalorder %s18, 1
      %p135 = por %p133, %p134
      %p136 = scmp.ne.s32.totalorder %s125, %s126
      %p137 = scmp.eq.s32.totalorder %s18, 0
      %p138 = por %p136, %p137
      %p139 = scmp.ne.s32.totalorder %s125, %s126
      %p140 = scmp.eq.s32.totalorder %s19, 1
      %p141 = por %p139, %p140
      %p143 = scmp.ne.s32.totalorder %s126, %s142
      %p144 = scmp.eq.s32.totalorder %s19, 0
      %p145 = por %p143, %p144
      %p146 = scmp.le.s32.totalorder 1, %s13
      %p147 = scmp.lt.s32.totalorder %s13, 3
      %p148 = pnand %p146, %p147
      %p149 = pneg %p148
      // Predicated region
      $region9: #{tpu_custom_call.1} parent=5 // pred_check
        _
      $region10: #{tpu_custom_call.1} parent=5 // pred_check_branch
        %151 = sbr.rel (%p148) target = $region12
      $region11: #{tpu_custom_call.1} parent=5 // pred_region
        %s152 = ssub.s32 %s13, 1
        // Predicated region
        $region13: #{tpu_custom_call.1} parent=11 // pred_check
          %p153 = pneg %p60
        $region14: #{tpu_custom_call.1} parent=11 // pred_check_branch
          %155 = sbr.rel (%p153) target = $region16
        $region15: #{tpu_custom_call.1} parent=11 // pred_region
          _
        $region16: #{tpu_custom_call.1} parent=11 // pred_fallthru
          _
      $region12: #{tpu_custom_call.1} parent=5 // pred_fallthru
        _
      %p156 = scmp.lt.s32.totalorder %s13, 2
      // Predicated region
      $region17: #{tpu_custom_call.1} parent=5 // pred_check
        %p157 = pneg %p156
      $region18: #{tpu_custom_call.1} parent=5 // pred_check_branch
        %159 = sbr.rel (%p157) target = $region20
      $region19: #{tpu_custom_call.1} parent=5 // pred_region
        // Predicated region
        $region21: #{tpu_custom_call.1} parent=19 // pred_check
          %p160 = pneg %p33
        $region22: #{tpu_custom_call.1} parent=19 // pred_check_branch
          %162 = sbr.rel (%p160) target = $region24
        $region23: #{tpu_custom_call.1} parent=19 // pred_region
          %p163 = scmp.lt.s32.totalorder %s13, 1
          %s164 = scalar_select %p163, %s13, 1
          %s165 = smul.addr %s164, 4
          %s166 = scalar_lea.vmem %s0, %s165
        $region24: #{tpu_custom_call.1} parent=19 // pred_fallthru
          _
        // Predicated region
        $region25: #{tpu_custom_call.1} parent=19 // pred_check
          %p167 = pneg %p80
        $region26: #{tpu_custom_call.1} parent=19 // pred_check_branch
          %169 = sbr.rel (%p167) target = $region28
        $region27: #{tpu_custom_call.1} parent=19 // pred_region
          %p170 = scmp.lt.s32.totalorder %s13, 1
          %s171 = scalar_select %p170, %s13, 1
          %s172 = smul.addr %s171, 4
          %s173 = scalar_lea.vmem %s2, %s172
        $region28: #{tpu_custom_call.1} parent=19 // pred_fallthru
          _
        // Predicated region
        $region29: #{tpu_custom_call.1} parent=19 // pred_check
          %p174 = pneg %p106
        $region30: #{tpu_custom_call.1} parent=19 // pred_check_branch
          %176 = sbr.rel (%p174) target = $region32
        $region31: #{tpu_custom_call.1} parent=19 // pred_region
          %p177 = scmp.lt.s32.totalorder %s13, 1
          %s178 = scalar_select %p177, %s13, 1
          %s179 = smul.addr %s178, 4
          %s180 = scalar_lea.vmem %s3, %s179
        $region32: #{tpu_custom_call.1} parent=19 // pred_fallthru
          _
      $region20: #{tpu_custom_call.1} parent=5 // pred_fallthru
        _
      %p181 = scmp.le.s32.totalorder 1, %s13
      %p182 = scmp.lt.s32.totalorder %s13, 3
      %p183 = pnand %p181, %p182
      %p184 = pneg %p183
      // Predicated region
      $region33: #{tpu_custom_call.1} parent=5 // pred_check
        _
      $region34: #{tpu_custom_call.1} parent=5 // pred_check_branch
        %186 = sbr.rel (%p183) target = $region36
      $region35: #{tpu_custom_call.1} parent=5 // pred_region
        %s187 = ssub.s32 %s13, 1
        %p188 = scmp.lt.s32.totalorder %s18, 1
        %s189 = scalar_select %p188, %s18, 1
        %s190 = smul.addr %s189, 4
        %s191 = scalar_lea.vmem %s0, %s190
        %p192 = pneg %p39
        %p193 = pneg %p36
        %p194 = pneg %p60
        %p195 = pneg %p57
        %p196 = scmp.lt.s32.totalorder %s18, 1
        %s197 = scalar_select %p196, %s18, 1
        %s198 = smul.addr %s197, 4
        %s199 = scalar_lea.vmem %s2, %s198
        %p200 = pneg %p86
        %p201 = pneg %p83
        %p202 = scmp.lt.s32.totalorder %s18, 1
        %s203 = scalar_select %p202, %s18, 1
        %s204 = smul.addr %s203, 4
        %s205 = scalar_lea.vmem %s3, %s204
        %p206 = pneg %p112
        %p207 = pneg %p109
        %p208 = pneg %p138
        %p209 = pneg %p135
        %s210 = sand.u32 %s125, 1
        %s211 = scalar_lea.sflag [#allocation3], %s210
        %s212 = sand.u32 %s125, 1
        %s213 = smul.addr %s212, 4
        %s214 = scalar_lea.vmem [#allocation2], %s213
        %p215 = scmp.lt.s32.totalorder %s18, 1
        %s216 = scalar_select %p215, %s18, 1
        %s217 = smul.addr %s216, 4
        %s218 = scalar_lea.vmem %s0, %s217
        %p219 = scmp.lt.s32.totalorder %s18, 1
        %s220 = scalar_select %p219, %s18, 1
        %s221 = smul.addr %s220, 4
        %s222 = scalar_lea.vmem %s2, %s221
        %p223 = scmp.lt.s32.totalorder %s18, 1
        %s224 = scalar_select %p223, %s18, 1
        %s225 = smul.addr %s224, 4
        %s226 = scalar_lea.vmem %s3, %s225
        %v227 = vld [vmem:[%s218] sm:$0xf]
        %v229 = vrot.slane %v227, 4
        %230 = vrot.lane.b32.xlu0 %v229, 126
        %v231 = vpop.permute.xlu0 %230
        %233 = vrot.lane.b32.xlu0 %v227, 124
        %v234 = vpop.permute.xlu0 %233
        %vm235 = vcmask 1043456
        %v236 = vsel %vm235, %v227, %v231
        %v237 = vld [vmem:[%s1] sm:$0xf]
        %vm238 = vcmask 97280
        %v240 = vsel %vm238, %v237, 0
        %v242 = vsel %vm235, %v234, 0
        %244 = vmatprep.subr.mxu0 0.0
        %245 = vmatpush1.msra.mxu0 0.0
        %246 = vmatprep.subr.mxu0 0.0
        %247 = vmatpush1.msra.mxu0 0.0
        %248 = vmatprep.subr.mxu0 0.0
        %249 = vmatpush1.msra.mxu0 0.0
        %250 = vmatprep.subr.mxu0 0.0
        %251 = vmatpush1.msra.mxu0 0.0
        %252 = vmatprep.subr.mxu0 0.0
        %253 = vmatpush1.msra.mxu0 0.0
        %254 = vmatprep.subr.mxu0 0.0
        %255 = vmatpush1.msra.mxu0 0.0
        %256 = vmatprep.subr.mxu0 0.0
        %257 = vmatpush1.msra.mxu0 0.0
        %258 = vmatprep.subr.mxu0 0.0
        %259 = vmatpush1.msra.mxu0 0.0
        %260 = vmatprep.subr.mxu0 0.0
        %261 = vmatpush1.msra.mxu0 0.0
        %262 = vmatprep.subr.mxu0 0.0
        %263 = vmatpush1.msra.mxu0 0.0
        %264 = vmatprep.subr.mxu0 0.0
        %265 = vmatpush1.msra.mxu0 0.0
        %266 = vmatprep.subr.mxu0 0.0
        %267 = vmatpush1.msra.mxu0 0.0
        %268 = vmatprep.subr.mxu0 0.0
        %269 = vmatpush1.msra.mxu0 0.0
        %270 = vmatprep.subr.mxu0 0.0
        %271 = vmatpush1.msra.mxu0 0.0
        %272 = vmatprep.subr.mxu0 0.0
        %273 = vmatpush1.msra.mxu0 %v242
        %274 = vmatprep.subr.mxu0 0.0
        %275 = vmatpush1.msra.mxu0 %v236
        %276 = vmatprep.subr.mxu0 0.0
        %277 = vmatpush2.msra.mxu0 0.0
        %278 = vmatprep.subr.mxu0 0.0
        %279 = vmatpush2.msra.mxu0 0.0
        %280 = vmatprep.subr.mxu0 0.0
        %281 = vmatpush2.msra.mxu0 0.0
        %282 = vmatprep.subr.mxu0 0.0
        %283 = vmatpush2.msra.mxu0 0.0
        %284 = vmatprep.subr.mxu0 0.0
        %285 = vmatpush2.msra.mxu0 0.0
        %286 = vmatprep.subr.mxu0 0.0
        %287 = vmatpush2.msra.mxu0 0.0
        %288 = vmatprep.subr.mxu0 0.0
        %289 = vmatpush2.msra.mxu0 0.0
        %290 = vmatprep.subr.mxu0 0.0
        %291 = vmatpush2.msra.mxu0 0.0
        %292 = vmatprep.subr.mxu0 0.0
        %293 = vmatpush2.msra.mxu0 0.0
        %294 = vmatprep.subr.mxu0 0.0
        %295 = vmatpush2.msra.mxu0 0.0
        %296 = vmatprep.subr.mxu0 0.0
        %297 = vmatpush2.msra.mxu0 0.0
        %298 = vmatprep.subr.mxu0 0.0
        %299 = vmatpush2.msra.mxu0 0.0
        %300 = vmatprep.subr.mxu0 0.0
        %301 = vmatpush2.msra.mxu0 0.0
        %302 = vmatprep.subr.mxu0 0.0
        %303 = vmatpush2.msra.mxu0 0.0
        %304 = vmatprep.subr.mxu0 0.0
        %305 = vmatpush2.msra.mxu0 0.0
        %306 = vmatprep.subr.mxu0 0.0
        %307 = vmatpush2.msra.mxu0 0.0
        %308 = vmatprep.mubr.f32.mxu0 0.0
        %309 = vmatmul.mubr.f32.gmra.mxu0 %v240
        %v310 = vpop.f32.mrf.mxu0
        %v311 = vadd.f32 0.0, %v310
        %v312 = vpop.f32.mrf.mxu0
        %313 = vdwg.mxu0
        %v314 = vld [vmem:[%s222] sm:$0xf]
        %v315 = vld [vmem:[%s226] sm:$0xf]
        %317 = vset.pattern.permute.xlu0 0
        %318 = vperm.xlu0 %317, %v314
        %v319 = vpop.permute.xlu0 %318
        %v321 = vmul.f32 %v311, %v319
        %323 = vset.pattern.permute.xlu0 0
        %324 = vperm.xlu0 %323, %v315
        %v325 = vpop.permute.xlu0 %324
        %v327 = vadd.f32 %v321, %v325
        %v328 = vmax.f32 %v327, 0.0
        %vm329 = vcmask 93184
        %330 = vst.msk [vmem:[%s214] sm:$0xf] %vm329, %v328
        %s331 = sand.u32 %s125, 1
        %s332 = scalar_lea.sflag [#allocation3], %s331
        %s333 = sand.u32 %s125, 1
        %s334 = smul.addr %s333, 4
        %s335 = scalar_lea.vmem [#allocation2], %s334
        // Predicated region
        $region37: #{tpu_custom_call.1} parent=35 // pred_check
          %p336 = pneg %p135
        $region38: #{tpu_custom_call.1} parent=35 // pred_check_branch
          %338 = sbr.rel (%p336) target = $region40
        $region39: #{tpu_custom_call.1} parent=35 // pred_region
          %s340 = ssub.s32 64, 64
          %341 = vsyncadd %s332, %s340
          %s342 = smul.addr %s18, 64
          %s343 = scalar_lea.hbm %s4, %s342
          %s345 = sshll.u32 %s335, 4
          %s346 = int_to_ptr.vmem [resolvable:$true] %s345
          %348 = dma.vmem_to_hbm [thread:$0]  %s346, 64, %s343, %s332
        $region40: #{tpu_custom_call.1} parent=35 // pred_fallthru
          _
      $region36: #{tpu_custom_call.1} parent=5 // pred_fallthru
        _
      %p349 = scmp.le.s32.totalorder 2, %s13
      // Predicated region
      $region41: #{tpu_custom_call.1} parent=5 // pred_check
        %p350 = pneg %p349
      $region42: #{tpu_custom_call.1} parent=5 // pred_check_branch
        %352 = sbr.rel (%p350) target = $region44
      $region43: #{tpu_custom_call.1} parent=5 // pred_region
        %s353 = ssub.s32 %s13, 2
        // Predicated region
        $region45: #{tpu_custom_call.1} parent=43 // pred_check
          %p354 = pneg %p141
        $region46: #{tpu_custom_call.1} parent=43 // pred_check_branch
          %356 = sbr.rel (%p354) target = $region48
        $region47: #{tpu_custom_call.1} parent=43 // pred_region
          %s357 = sand.u32 %s126, 1
          %s358 = scalar_lea.sflag [#allocation3], %s357
          %s359 = sand.u32 %s126, 1
          %s360 = smul.addr %s359, 4
          %s361 = scalar_lea.vmem [#allocation2], %s360
          %362 = dma.done %s358, 64
        $region48: #{tpu_custom_call.1} parent=43 // pred_fallthru
          _
      $region44: #{tpu_custom_call.1} parent=5 // pred_fallthru
        _
    $region6: #{tpu_custom_call.1} parent=1 // loop_footer
      %s17 = sadd.s32 1, %s13
    $region7: #{tpu_custom_call.1} parent=1 // loop_footer_branch
      %12 = sbr.rel target = $region3
    $region8: #{tpu_custom_call.1} parent=1 // loop_exit
      _
    %363 = vsyncpa [#allocation3], 1
    %s364 = scalar_lea.sflag [#allocation3], 1
    %365 = vsyncpa %s364, 1

</llo_original>
